<compile_context>
chip_gen: v7x
topology: tpu7x:2x2x1
jax: 0.10.0
libtpu: 0.0.40
codegen_flags: <defaults>
</compile_context>

<pallas_src>
import jax
import jax.numpy as jnp
from jax.experimental import pallas as pl
from jax.experimental.pallas import tpu as pltpu

F32 = jnp.float32
BF16 = jnp.bfloat16

GATE_HIDDEN = 32          # hidden width of the gate MLP (fixed in the reference module)
OUT_LANES = 128           # lane-dense padded output width


def bond_block_kernel(h_bond_ref, h_node_ref, time_ref, idx_ref,
                      w_slab_ref, f32_ref, out_ref):
    B, bond_dim = h_bond_ref.shape            # (8, 32)
    N_pad, node_dim = h_node_ref.shape        # (8, 16)
    TWO_B = idx_ref.shape[1]                  # 2*B
    inter = 2 * bond_dim                      # 64 per side
    GH = GATE_HIDDEN                          # 32 per side
    c_gate = 2 * inter                        # 128: start of gate lanes
    c_res = c_gate + 2 * GH                   # 192: start of residual lanes
    W1 = c_res + 2 * bond_dim                 # 256: fused first-layer width

    # weight-slab row offsets (must match pack_bond_block_params)
    r0 = 0                                    # W1_bond  (bond_dim, 256)
    r1 = r0 + bond_dim                        # W1_node  (node_dim, 256)
    r2 = r1 + node_dim                        # w_m1 block-diag (128, 128)
    r3 = r2 + 2 * inter                       # W2 block-diag (192, 128)
    r4 = r3 + 2 * inter + 2 * GH              # w_out padded (bond_dim, 128)

    h_bond_bf = h_bond_ref[...].astype(BF16)          # (B, 32)
    h_node_bf = h_node_ref[...].astype(BF16)          # (N_pad, 16)
    t = time_ref[...]                                  # (B, 1) f32
    idxp = idx_ref[...]                                # (N_pad + 2B, 2B) int32

    # f32 bias / LayerNorm slab
    fs = f32_ref[...]                                  # (8, 128)
    b_m1 = fs[0:1, :]                                  # (1, 128)
    b_2 = fs[1:2, :]                                   # (1, 128): [b_m2_L|b_m2_R|b_g2_L|b_g2_R]
    b_g1 = fs[2:3, 0:2 * GH]                           # (1, 64)
    w_g1t = fs[3:4, 0:2 * GH]                          # (1, 64)
    b_res = fs[4:5, 0:bond_dim]                        # (1, 32)
    ln_g = fs[5:6, 0:bond_dim]
    ln_b = fs[6:7, 0:bond_dim]
    b_out = fs[7:8, :]                                 # (1, 128), lanes >= 32 are zero

    # ------------------------------------------------------------------
    # One-hot index matrices from the single packed index slab.
    # Rows/cols 0:B correspond to left_node, B:2B to right_node.
    # ------------------------------------------------------------------
    row_form = idxp[0:N_pad, :]                        # (N_pad, 2B): idx[j] along lanes
    col_form = idxp[N_pad:N_pad + TWO_B, 0:N_pad]      # (2B, N_pad): idx[i] along sublanes
    iota_r = jax.lax.broadcasted_iota(jnp.int32, (N_pad, TWO_B), 0)
    iota_c = jax.lax.broadcasted_iota(jnp.int32, (TWO_B, N_pad), 1)
    onehot_t_f32 = (iota_r == row_form).astype(F32)    # (N_pad, 2B)  scatter matrix
    onehot_f32 = (iota_c == col_form).astype(F32)      # (2B, N_pad)  gather matrix
    onehot_bf = onehot_f32.astype(BF16)

    # Fused node gather: [h_node[left]; h_node[right]]  (exact one-hot selection)
    nodes_lr_bf = jnp.dot(onehot_bf, h_node_bf,
                          preferred_element_type=F32).astype(BF16)       # (2B, node_dim)

    # ------------------------------------------------------------------
    # Fused first layers: one dot from h_bond, one from the gathered nodes.
    # Lane layout of the 256-wide result:
    #   [0:64]   left inter   [64:128]  right inter
    #   [128:160] left gate   [160:192] right gate
    #   [192:224] residual-left slot    [224:256] residual-right slot
    # ------------------------------------------------------------------
    bond_out = jnp.dot(h_bond_bf, w_slab_ref[r0:r1, :],
                       preferred_element_type=F32)                       # (B, 256)
    node_raw = jnp.dot(nodes_lr_bf, w_slab_ref[r1:r2, :],
                       preferred_element_type=F32)                       # (2B, 256)

    # Single reused lane iota for all lane-select masks.
    lane = jax.lax.broadcasted_iota(jnp.int32, (B, W1), 1)               # (B, 256)
    is_left = ((lane < inter)
               | ((lane >= c_gate) & (lane < c_gate + GH))
               | ((lane >= c_res) & (lane < c_res + bond_dim)))
    sel = jnp.where(is_left, node_raw[:B], node_raw[B:])                 # (B, 256)

    inter_lr = bond_out[:, 0:c_gate] * sel[:, 0:c_gate]                  # (B, 128)
    g = (bond_out[:, c_gate:c_res] + sel[:, c_gate:c_res]
         + t * w_g1t + b_g1)                                             # (B, 64)
    relu_g = jnp.maximum(g, 0.0)
    # residual: self_ffn(h_bond) + node_ffn_left(h_node[left]) + node_ffn_right(h_node[right])
    res_part = (bond_out[:, c_res:c_res + bond_dim]
                + sel[:, c_res:c_res + bond_dim]
                + sel[:, c_res + bond_dim:W1]
                + b_res)                                                 # (B, 32)

    # Fused inter-MLP hidden layer (block-diagonal left|right).
    hid = jnp.maximum(
        jnp.dot(inter_lr.astype(BF16), w_slab_ref[r2:r3, 0:c_gate],
                preferred_element_type=F32) + b_m1, 0.0)                 # (B, 128)

    # Fused second layers of inter-MLP and gate-MLP: one (192,128) block-diag dot.
    lhs2 = jnp.concatenate([hid, relu_g], axis=-1).astype(BF16)          # (B, 192)
    y2 = jnp.dot(lhs2, w_slab_ref[r3:r4, 0:c_gate],
                 preferred_element_type=F32) + b_2                       # (B, 128)
    msg_raw = y2[:, 0:2 * bond_dim] * jax.nn.sigmoid(y2[:, 2 * bond_dim:4 * bond_dim])
    # (B, 64): [msg_left | msg_right]

    # ------------------------------------------------------------------
    # Fused scatter_sum + gather (routing), kept in f32:
    #   msg_left : scatter by right_node, gather by left_node
    #   msg_right: scatter by left_node,  gather by right_node
    # ------------------------------------------------------------------
    l64 = lane[:, 0:2 * bond_dim]
    msg_left_only = jnp.where(l64 < bond_dim, msg_raw, 0.0)              # [msg_left | 0]
    msg_right_only = jnp.where(l64 < bond_dim, 0.0, msg_raw)             # [0 | msg_right]
    msg_stack = jnp.concatenate([msg_right_only, msg_left_only], axis=0)  # (2B, 64)
    scat = jnp.dot(onehot_t_f32, msg_stack, preferred_element_type=F32)   # (N_pad, 64)
    gathered = jnp.dot(onehot_f32, scat, preferred_element_type=F32)      # (2B, 64)
    msg_sum = gathered[:B, 0:bond_dim] + gathered[B:, bond_dim:2 * bond_dim]  # (B, 32)

    # Residual sum + LayerNorm (eps=1e-5, biased variance) + relu + out_transform.
    h = msg_sum + res_part
    mean = jnp.mean(h, axis=-1, keepdims=True)
    var = jnp.mean((h - mean) ** 2, axis=-1, keepdims=True)
    h = (h - mean) * jax.lax.rsqrt(var + 1e-5) * ln_g + ln_b
    h = jnp.maximum(h, 0.0)

    # Lane-dense (B, 128) store; true result sits in lanes [0:bond_dim].
    out_ref[...] = (jnp.dot(h.astype(BF16), w_slab_ref[r4:r4 + bond_dim, 0:c_gate],
                            preferred_element_type=F32) + b_out)


def init_params(key, bond_dim, node_dim):
    inter = 2 * bond_dim
    gate_hidden = GATE_HIDDEN
    keys = iter(jax.random.split(key, 64))

    def w(din, dout):
        return jax.random.normal(next(keys), (din, dout), F32) * 0.1

    def b(dout):
        return jax.random.normal(next(keys), (1, dout), F32) * 0.1

    def ffn_params():
        return dict(
            w_bond=w(bond_dim, inter),               # Linear(bond_dim, inter, bias=False)
            w_node=w(node_dim, inter),               # Linear(node_dim, inter, bias=False)
            w_m1=w(inter, inter), b_m1=b(inter),     # MLP hidden
            w_m2=w(inter, bond_dim), b_m2=b(bond_dim),   # MLP out
            w_g1b=w(bond_dim, gate_hidden),          # gate MLP first layer (split weights)
            w_g1n=w(node_dim, gate_hidden),
            w_g1t=w(1, gate_hidden),
            b_g1=b(gate_hidden),
            w_g2=w(gate_hidden, bond_dim), b_g2=b(bond_dim),
        )

    return dict(
        ffn_left=ffn_params(),
        ffn_right=ffn_params(),
        w_node_left=w(node_dim, bond_dim), b_node_left=b(bond_dim),
        w_node_right=w(node_dim, bond_dim), b_node_right=b(bond_dim),
        w_self=w(bond_dim, bond_dim), b_self=b(bond_dim),
        ln_gamma=jnp.ones((1, bond_dim), F32),
        ln_beta=jnp.zeros((1, bond_dim), F32),
        w_out=w(bond_dim, bond_dim), b_out=b(bond_dim),
    )


def pack_bond_block_params(params, bond_dim=32, node_dim=16):
    """One-time packing of all weights into a bf16 slab and an f32 bias slab."""
    inter = 2 * bond_dim
    GH = GATE_HIDDEN
    c_gate = 2 * inter
    c_res = c_gate + 2 * GH
    W1 = c_res + 2 * bond_dim                       # 256
    pL, pR = params["ffn_left"], params["ffn_right"]

    # -- fused first layer from bond: bond_linear(L|R) | gate-bond(L|R) | self_ffn | 0
    w1_bond = jnp.zeros((bond_dim, W1), F32)
    w1_bond = w1_bond.at[:, 0:inter].set(pL["w_bond"])
    w1_bond = w1_bond.at[:, inter:c_gate].set(pR["w_bond"])
    w1_bond = w1_bond.at[:, c_gate:c_gate + GH].set(pL["w_g1b"])
    w1_bond = w1_bond.at[:, c_gate + GH:c_res].set(pR["w_g1b"])
    w1_bond = w1_bond.at[:, c_res:c_res + bond_dim].set(params["w_self"])

    # -- fused first layer from nodes: node_linear(L|R) | gate-node(L|R) | node_ffn_left | node_ffn_right
    w1_node = jnp.zeros((node_dim, W1), F32)
    w1_node = w1_node.at[:, 0:inter].set(pL["w_node"])
    w1_node = w1_node.at[:, inter:c_gate].set(pR["w_node"])
    w1_node = w1_node.at[:, c_gate:c_gate + GH].set(pL["w_g1n"])
    w1_node = w1_node.at[:, c_gate + GH:c_res].set(pR["w_g1n"])
    w1_node = w1_node.at[:, c_res:c_res + bond_dim].set(params["w_node_left"])
    w1_node = w1_node.at[:, c_res + bond_dim:W1].set(params["w_node_right"])

    # -- full weight slab (rows are sublanes, 256-lane wide, bf16)
    R = bond_dim + node_dim + 2 * inter + (2 * inter + 2 * GH) + bond_dim   # 400
    slab = jnp.zeros((R, W1), F32)
    r = 0
    slab = slab.at[r:r + bond_dim, :].set(w1_bond); r += bond_dim
    slab = slab.at[r:r + node_dim, :].set(w1_node); r += node_dim
    # inter-MLP hidden layer, block-diagonal (128, 128) in lanes [0:128]
    slab = slab.at[r:r + inter, 0:inter].set(pL["w_m1"])
    slab = slab.at[r + inter:r + 2 * inter, inter:2 * inter].set(pR["w_m1"])
    r += 2 * inter
    # fused second layers (192, 128): [w_m2_L; w_m2_R; w_g2_L; w_g2_R] block-diag
    slab = slab.at[r:r + inter, 0:bond_dim].set(pL["w_m2"])
    slab = slab.at[r + inter:r + 2 * inter, bond_dim:2 * bond_dim].set(pR["w_m2"])
    slab = slab.at[r + 2 * inter:r + 2 * inter + GH, 2 * bond_dim:3 * bond_dim].set(pL["w_g2"])
    slab = slab.at[r + 2 * inter + GH:r + 2 * inter + 2 * GH, 3 * bond_dim:4 * bond_dim].set(pR["w_g2"])
    r += 2 * inter + 2 * GH
    # out_transform, output padded to 128 lanes for a lane-dense store
    slab = slab.at[r:r + bond_dim, 0:bond_dim].set(params["w_out"])
    w_slab = slab.astype(BF16)

    # -- f32 bias / LayerNorm slab (8, 128)
    fs = jnp.zeros((8, 128), F32)
    fs = fs.at[0, 0:inter].set(pL["b_m1"][0]).at[0, inter:2 * inter].set(pR["b_m1"][0])
    fs = fs.at[1, 0:bond_dim].set(pL["b_m2"][0]).at[1, bond_dim:2 * bond_dim].set(pR["b_m2"][0])
    fs = fs.at[1, 2 * bond_dim:3 * bond_dim].set(pL["b_g2"][0]).at[1, 3 * bond_dim:4 * bond_dim].set(pR["b_g2"][0])
    fs = fs.at[2, 0:GH].set(pL["b_g1"][0]).at[2, GH:2 * GH].set(pR["b_g1"][0])
    fs = fs.at[3, 0:GH].set(pL["w_g1t"][0]).at[3, GH:2 * GH].set(pR["w_g1t"][0])
    b_res = params["b_node_left"] + params["b_node_right"] + params["b_self"]
    fs = fs.at[4, 0:bond_dim].set(b_res[0])
    fs = fs.at[5, 0:bond_dim].set(params["ln_gamma"][0])
    fs = fs.at[6, 0:bond_dim].set(params["ln_beta"][0])
    fs = fs.at[7, 0:bond_dim].set(params["b_out"][0])

    return dict(w_slab=w_slab, f32_slab=fs)


def bond_block_forward(h_bond, bond_index, h_node, time, packed):
    B, bond_dim = h_bond.shape
    N, node_dim = h_node.shape
    assert B % 8 == 0, "bond count must be a multiple of 8 (pad bonds)"
    N_pad = max(8, -(-N // 8) * 8)
    h_node_p = jnp.pad(h_node, ((0, N_pad - N), (0, 0)))

    # NOTE: indices outside [0, N) silently produce zero gather rows (torch would raise).
    idx = jnp.concatenate([bond_index[0], bond_index[1]], axis=0).astype(jnp.int32)  # (2B,)
    # Single packed index slab carrying both one-hot orientations:
    #   rows [0:N_pad)      : idx broadcast along sublanes (values along lanes)
    #   rows [N_pad:N_pad+2B): idx[i] broadcast along lanes (values along sublanes)
    idx_pack = jnp.concatenate(
        [jnp.broadcast_to(idx[None, :], (N_pad, 2 * B)),
         jnp.broadcast_to(idx[:, None], (2 * B, 2 * B))], axis=0)

    out_pad = pl.pallas_call(
        bond_block_kernel,
        out_shape=jax.ShapeDtypeStruct((B, OUT_LANES), F32),
        in_specs=[pl.BlockSpec(memory_space=pltpu.MemorySpace.VMEM)] * 6,
        out_specs=pl.BlockSpec(memory_space=pltpu.MemorySpace.VMEM),
    )(h_bond, h_node_p, time, idx_pack, packed["w_slab"], packed["f32_slab"])
    return out_pad[:, :bond_dim]


if __name__ == "__main__":
    bond_dim, node_dim = 32, 16
    B, N = 8, 6  # number of bonds (edges), number of nodes

    key = jax.random.PRNGKey(0)
    k1, k2, k3, k4, k5 = jax.random.split(key, 5)
    h_bond = jax.random.normal(k1, (B, bond_dim), F32)
    h_node = jax.random.normal(k2, (N, node_dim), F32)
    bond_index = jax.random.randint(k3, (2, B), 0, N, dtype=jnp.int32)
    time = jax.random.uniform(k4, (B, 1), F32)

    params = init_params(k5, bond_dim, node_dim)
    packed = pack_bond_block_params(params, bond_dim, node_dim)   # one-time weight pack

    fwd = jax.jit(bond_block_forward)
    out = fwd(h_bond, bond_index, h_node, time, packed)
    out = jax.block_until_ready(out)
    assert out.shape == (B, bond_dim)
    assert bool(jnp.all(jnp.isfinite(out)))
    print("KERNEL_OK")
</pallas_src>

<mosaic_0001>
module attributes {stable_mosaic.version = 11 : i64} {
  func.func @bond_block_kernel(%arg0: memref<8x32xf32, #tpu.memory_space<vmem>>, %arg1: memref<8x16xf32, #tpu.memory_space<vmem>>, %arg2: memref<8x1xf32, #tpu.memory_space<vmem>>, %arg3: memref<24x16xi32, #tpu.memory_space<vmem>>, %arg4: memref<400x256xbf16, #tpu.memory_space<vmem>>, %arg5: memref<8x128xf32, #tpu.memory_space<vmem>>, %arg6: memref<8x128xf32, #tpu.memory_space<vmem>>) attributes {dimension_semantics = [], scalar_prefetch = 0 : i64, scratch_operands = 0 : i64, tpu.core_type = #tpu.core_type<tc>} {
    %c0 = arith.constant 0 : index
    %c0_0 = arith.constant 0 : index
    %0 = vector.load %arg0[%c0, %c0_0] : memref<8x32xf32, #tpu.memory_space<vmem>>, vector<8x32xf32>
    %1 = arith.truncf %0 : vector<8x32xf32> to vector<8x32xbf16>
    %c0_1 = arith.constant 0 : index
    %c0_2 = arith.constant 0 : index
    %2 = vector.load %arg1[%c0_1, %c0_2] : memref<8x16xf32, #tpu.memory_space<vmem>>, vector<8x16xf32>
    %3 = arith.truncf %2 : vector<8x16xf32> to vector<8x16xbf16>
    %c0_3 = arith.constant 0 : index
    %c0_4 = arith.constant 0 : index
    %4 = vector.load %arg2[%c0_3, %c0_4] : memref<8x1xf32, #tpu.memory_space<vmem>>, vector<8x1xf32>
    %c0_5 = arith.constant 0 : index
    %c0_6 = arith.constant 0 : index
    %5 = vector.load %arg3[%c0_5, %c0_6] : memref<24x16xi32, #tpu.memory_space<vmem>>, vector<24x16xi32>
    %c0_7 = arith.constant 0 : index
    %c0_8 = arith.constant 0 : index
    %6 = vector.load %arg5[%c0_7, %c0_8] : memref<8x128xf32, #tpu.memory_space<vmem>>, vector<8x128xf32>
    %7 = vector.extract_strided_slice %6 {offsets = [0, 0], sizes = [1, 128], strides = [1, 1]} : vector<8x128xf32> to vector<1x128xf32>
    %8 = vector.extract_strided_slice %6 {offsets = [1, 0], sizes = [1, 128], strides = [1, 1]} : vector<8x128xf32> to vector<1x128xf32>
    %9 = vector.extract_strided_slice %6 {offsets = [2, 0], sizes = [1, 64], strides = [1, 1]} : vector<8x128xf32> to vector<1x64xf32>
    %10 = vector.extract_strided_slice %6 {offsets = [3, 0], sizes = [1, 64], strides = [1, 1]} : vector<8x128xf32> to vector<1x64xf32>
    %11 = vector.extract_strided_slice %6 {offsets = [4, 0], sizes = [1, 32], strides = [1, 1]} : vector<8x128xf32> to vector<1x32xf32>
    %12 = vector.extract_strided_slice %6 {offsets = [5, 0], sizes = [1, 32], strides = [1, 1]} : vector<8x128xf32> to vector<1x32xf32>
    %13 = vector.extract_strided_slice %6 {offsets = [6, 0], sizes = [1, 32], strides = [1, 1]} : vector<8x128xf32> to vector<1x32xf32>
    %14 = vector.extract_strided_slice %6 {offsets = [7, 0], sizes = [1, 128], strides = [1, 1]} : vector<8x128xf32> to vector<1x128xf32>
    %15 = vector.extract_strided_slice %5 {offsets = [0, 0], sizes = [8, 16], strides = [1, 1]} : vector<24x16xi32> to vector<8x16xi32>
    %16 = vector.extract_strided_slice %5 {offsets = [8, 0], sizes = [16, 8], strides = [1, 1]} : vector<24x16xi32> to vector<16x8xi32>
    %17 = tpu.iota {dimensions = array<i32: 0>} : vector<8x16xi32>
    %18 = tpu.iota {dimensions = array<i32: 1>} : vector<16x8xi32>
    %19 = arith.cmpi eq, %17, %15 : vector<8x16xi32>
    %20 = arith.extui %19 : vector<8x16xi1> to vector<8x16xi32>
    %21 = arith.sitofp %20 : vector<8x16xi32> to vector<8x16xf32>
    %22 = arith.cmpi eq, %18, %16 : vector<16x8xi32>
    %23 = arith.extui %22 : vector<16x8xi1> to vector<16x8xi32>
    %24 = arith.sitofp %23 : vector<16x8xi32> to vector<16x8xf32>
    %25 = arith.truncf %24 : vector<16x8xf32> to vector<16x8xbf16>
    %cst = arith.constant dense<0.000000e+00> : vector<16x16xf32>
    %26 = tpu.matmul %25, %3, %cst {dimension_numbers = #tpu.dot_dimension_numbers<[1], [0], [0], [1], [0, 0, 1, 1], [], []>} : vector<16x8xbf16>, vector<8x16xbf16>, vector<16x16xf32> -> vector<16x16xf32>
    %27 = arith.truncf %26 : vector<16x16xf32> to vector<16x16xbf16>
    %c0_9 = arith.constant 0 : index
    %c0_10 = arith.constant 0 : index
    %28 = vector.load %arg4[%c0_9, %c0_10] : memref<400x256xbf16, #tpu.memory_space<vmem>>, vector<32x256xbf16>
    %cst_11 = arith.constant dense<0.000000e+00> : vector<8x256xf32>
    %29 = tpu.matmul %1, %28, %cst_11 {dimension_numbers = #tpu.dot_dimension_numbers<[1], [0], [0], [1], [0, 0, 1, 1], [], []>} : vector<8x32xbf16>, vector<32x256xbf16>, vector<8x256xf32> -> vector<8x256xf32>
    %c32 = arith.constant 32 : index
    %c0_12 = arith.constant 0 : index
    %30 = vector.load %arg4[%c32, %c0_12] : memref<400x256xbf16, #tpu.memory_space<vmem>>, vector<16x256xbf16>
    %cst_13 = arith.constant dense<0.000000e+00> : vector<16x256xf32>
    %31 = tpu.matmul %27, %30, %cst_13 {dimension_numbers = #tpu.dot_dimension_numbers<[1], [0], [0], [1], [0, 0, 1, 1], [], []>} : vector<16x16xbf16>, vector<16x256xbf16>, vector<16x256xf32> -> vector<16x256xf32>
    %32 = tpu.iota {dimensions = array<i32: 1>} : vector<8x256xi32>
    %c64_i32 = arith.constant 64 : i32
    %33 = vector.broadcast %c64_i32 : i32 to vector<8x256xi32>
    %34 = arith.cmpi slt, %32, %33 : vector<8x256xi32>
    %c128_i32 = arith.constant 128 : i32
    %35 = vector.broadcast %c128_i32 : i32 to vector<8x256xi32>
    %36 = arith.cmpi sge, %32, %35 : vector<8x256xi32>
    %c160_i32 = arith.constant 160 : i32
    %37 = vector.broadcast %c160_i32 : i32 to vector<8x256xi32>
    %38 = arith.cmpi slt, %32, %37 : vector<8x256xi32>
    %39 = arith.andi %36, %38 : vector<8x256xi1>
    %40 = arith.ori %34, %39 : vector<8x256xi1>
    %c192_i32 = arith.constant 192 : i32
    %41 = vector.broadcast %c192_i32 : i32 to vector<8x256xi32>
    %42 = arith.cmpi sge, %32, %41 : vector<8x256xi32>
    %c224_i32 = arith.constant 224 : i32
    %43 = vector.broadcast %c224_i32 : i32 to vector<8x256xi32>
    %44 = arith.cmpi slt, %32, %43 : vector<8x256xi32>
    %45 = arith.andi %42, %44 : vector<8x256xi1>
    %46 = arith.ori %40, %45 : vector<8x256xi1>
    %47 = vector.extract_strided_slice %31 {offsets = [0, 0], sizes = [8, 256], strides = [1, 1]} : vector<16x256xf32> to vector<8x256xf32>
    %48 = vector.extract_strided_slice %31 {offsets = [8, 0], sizes = [8, 256], strides = [1, 1]} : vector<16x256xf32> to vector<8x256xf32>
    %49 = arith.select %46, %47, %48 : vector<8x256xi1>, vector<8x256xf32>
    %50 = vector.extract_strided_slice %29 {offsets = [0, 0], sizes = [8, 128], strides = [1, 1]} : vector<8x256xf32> to vector<8x128xf32>
    %51 = vector.extract_strided_slice %49 {offsets = [0, 0], sizes = [8, 128], strides = [1, 1]} : vector<8x256xf32> to vector<8x128xf32>
    %52 = arith.mulf %50, %51 : vector<8x128xf32>
    %53 = vector.extract_strided_slice %29 {offsets = [0, 128], sizes = [8, 64], strides = [1, 1]} : vector<8x256xf32> to vector<8x64xf32>
    %54 = vector.extract_strided_slice %49 {offsets = [0, 128], sizes = [8, 64], strides = [1, 1]} : vector<8x256xf32> to vector<8x64xf32>
    %55 = arith.addf %53, %54 : vector<8x64xf32>
    %56 = vector.broadcast %4 : vector<8x1xf32> to vector<8x64xf32>
    %57 = vector.broadcast %10 : vector<1x64xf32> to vector<8x64xf32>
    %58 = arith.mulf %56, %57 : vector<8x64xf32>
    %59 = arith.addf %55, %58 : vector<8x64xf32>
    %60 = vector.broadcast %9 : vector<1x64xf32> to vector<8x64xf32>
    %61 = arith.addf %59, %60 : vector<8x64xf32>
    %cst_14 = arith.constant 0.000000e+00 : f32
    %62 = vector.broadcast %cst_14 : f32 to vector<8x64xf32>
    %63 = arith.maximumf %61, %62 : vector<8x64xf32>
    %64 = vector.extract_strided_slice %29 {offsets = [0, 192], sizes = [8, 32], strides = [1, 1]} : vector<8x256xf32> to vector<8x32xf32>
    %65 = vector.extract_strided_slice %49 {offsets = [0, 192], sizes = [8, 32], strides = [1, 1]} : vector<8x256xf32> to vector<8x32xf32>
    %66 = arith.addf %64, %65 : vector<8x32xf32>
    %67 = vector.extract_strided_slice %49 {offsets = [0, 224], sizes = [8, 32], strides = [1, 1]} : vector<8x256xf32> to vector<8x32xf32>
    %68 = arith.addf %66, %67 : vector<8x32xf32>
    %69 = vector.broadcast %11 : vector<1x32xf32> to vector<8x32xf32>
    %70 = arith.addf %68, %69 : vector<8x32xf32>
    %71 = arith.truncf %52 : vector<8x128xf32> to vector<8x128xbf16>
    %c48 = arith.constant 48 : index
    %c0_15 = arith.constant 0 : index
    %72 = vector.load %arg4[%c48, %c0_15] : memref<400x256xbf16, #tpu.memory_space<vmem>>, vector<128x128xbf16>
    %cst_16 = arith.constant dense<0.000000e+00> : vector<8x128xf32>
    %73 = tpu.matmul %71, %72, %cst_16 {dimension_numbers = #tpu.dot_dimension_numbers<[1], [0], [0], [1], [0, 0, 1, 1], [], []>} : vector<8x128xbf16>, vector<128x128xbf16>, vector<8x128xf32> -> vector<8x128xf32>
    %74 = vector.broadcast %7 : vector<1x128xf32> to vector<8x128xf32>
    %75 = arith.addf %73, %74 : vector<8x128xf32>
    %cst_17 = arith.constant 0.000000e+00 : f32
    %76 = vector.broadcast %cst_17 : f32 to vector<8x128xf32>
    %77 = arith.maximumf %75, %76 : vector<8x128xf32>
    %78 = tpu.concatenate %77, %63 in 1 : vector<8x128xf32>, vector<8x64xf32> -> vector<8x192xf32>
    %79 = arith.truncf %78 : vector<8x192xf32> to vector<8x192xbf16>
    %c176 = arith.constant 176 : index
    %c0_18 = arith.constant 0 : index
    %80 = vector.load %arg4[%c176, %c0_18] : memref<400x256xbf16, #tpu.memory_space<vmem>>, vector<192x128xbf16>
    %cst_19 = arith.constant dense<0.000000e+00> : vector<8x128xf32>
    %81 = tpu.matmul %79, %80, %cst_19 {dimension_numbers = #tpu.dot_dimension_numbers<[1], [0], [0], [1], [0, 0, 1, 1], [], []>} : vector<8x192xbf16>, vector<192x128xbf16>, vector<8x128xf32> -> vector<8x128xf32>
    %82 = vector.broadcast %8 : vector<1x128xf32> to vector<8x128xf32>
    %83 = arith.addf %81, %82 : vector<8x128xf32>
    %84 = vector.extract_strided_slice %83 {offsets = [0, 0], sizes = [8, 64], strides = [1, 1]} : vector<8x128xf32> to vector<8x64xf32>
    %85 = vector.extract_strided_slice %83 {offsets = [0, 64], sizes = [8, 64], strides = [1, 1]} : vector<8x128xf32> to vector<8x64xf32>
    %86 = arith.negf %85 : vector<8x64xf32>
    %87 = math.exp %86 : vector<8x64xf32>
    %cst_20 = arith.constant 1.000000e+00 : f32
    %88 = vector.broadcast %cst_20 : f32 to vector<8x64xf32>
    %89 = arith.addf %88, %87 : vector<8x64xf32>
    %90 = arith.divf %88, %89 : vector<8x64xf32>
    %91 = arith.mulf %84, %90 : vector<8x64xf32>
    %92 = vector.extract_strided_slice %32 {offsets = [0, 0], sizes = [8, 64], strides = [1, 1]} : vector<8x256xi32> to vector<8x64xi32>
    %c32_i32 = arith.constant 32 : i32
    %93 = vector.broadcast %c32_i32 : i32 to vector<8x64xi32>
    %94 = arith.cmpi slt, %92, %93 : vector<8x64xi32>
    %cst_21 = arith.constant 0.000000e+00 : f32
    %95 = vector.broadcast %cst_21 : f32 to vector<8x64xf32>
    %96 = arith.select %94, %91, %95 : vector<8x64xi1>, vector<8x64xf32>
    %c32_i32_22 = arith.constant 32 : i32
    %97 = vector.broadcast %c32_i32_22 : i32 to vector<8x64xi32>
    %98 = arith.cmpi slt, %92, %97 : vector<8x64xi32>
    %cst_23 = arith.constant 0.000000e+00 : f32
    %99 = vector.broadcast %cst_23 : f32 to vector<8x64xf32>
    %100 = arith.select %98, %99, %91 : vector<8x64xi1>, vector<8x64xf32>
    %101 = tpu.concatenate %100, %96 in 0 : vector<8x64xf32>, vector<8x64xf32> -> vector<16x64xf32>
    %cst_24 = arith.constant dense<0.000000e+00> : vector<8x64xf32>
    %102 = tpu.matmul %21, %101, %cst_24 {dimension_numbers = #tpu.dot_dimension_numbers<[1], [0], [0], [1], [0, 0, 1, 1], [], []>} : vector<8x16xf32>, vector<16x64xf32>, vector<8x64xf32> -> vector<8x64xf32>
    %cst_25 = arith.constant dense<0.000000e+00> : vector<16x64xf32>
    %103 = tpu.matmul %24, %102, %cst_25 {dimension_numbers = #tpu.dot_dimension_numbers<[1], [0], [0], [1], [0, 0, 1, 1], [], []>} : vector<16x8xf32>, vector<8x64xf32>, vector<16x64xf32> -> vector<16x64xf32>
    %104 = vector.extract_strided_slice %103 {offsets = [0, 0], sizes = [8, 32], strides = [1, 1]} : vector<16x64xf32> to vector<8x32xf32>
    %105 = vector.extract_strided_slice %103 {offsets = [8, 32], sizes = [8, 32], strides = [1, 1]} : vector<16x64xf32> to vector<8x32xf32>
    %106 = arith.addf %104, %105 : vector<8x32xf32>
    %107 = arith.addf %106, %70 : vector<8x32xf32>
    %cst_26 = arith.constant dense<0.000000e+00> : vector<8xf32>
    %108 = vector.multi_reduction <add>, %107, %cst_26 [1] : vector<8x32xf32> to vector<8xf32>
    %109 = vector.shape_cast %108 : vector<8xf32> to vector<8x1xf32>
    %cst_27 = arith.constant 3.200000e+01 : f32
    %110 = vector.broadcast %cst_27 : f32 to vector<8x1xf32>
    %111 = arith.divf %109, %110 : vector<8x1xf32>
    %112 = vector.broadcast %111 : vector<8x1xf32> to vector<8x32xf32>
    %113 = arith.subf %107, %112 : vector<8x32xf32>
    %114 = arith.mulf %113, %113 : vector<8x32xf32>
    %cst_28 = arith.constant dense<0.000000e+00> : vector<8xf32>
    %115 = vector.multi_reduction <add>, %114, %cst_28 [1] : vector<8x32xf32> to vector<8xf32>
    %116 = vector.shape_cast %115 : vector<8xf32> to vector<8x1xf32>
    %cst_29 = arith.constant 3.200000e+01 : f32
    %117 = vector.broadcast %cst_29 : f32 to vector<8x1xf32>
    %118 = arith.divf %116, %117 : vector<8x1xf32>
    %119 = vector.broadcast %111 : vector<8x1xf32> to vector<8x32xf32>
    %120 = arith.subf %107, %119 : vector<8x32xf32>
    %cst_30 = arith.constant 9.99999974E-6 : f32
    %121 = vector.broadcast %cst_30 : f32 to vector<8x1xf32>
    %122 = arith.addf %118, %121 : vector<8x1xf32>
    %123 = math.rsqrt %122 : vector<8x1xf32>
    %124 = vector.broadcast %123 : vector<8x1xf32> to vector<8x32xf32>
    %125 = arith.mulf %120, %124 : vector<8x32xf32>
    %126 = vector.broadcast %12 : vector<1x32xf32> to vector<8x32xf32>
    %127 = arith.mulf %125, %126 : vector<8x32xf32>
    %128 = vector.broadcast %13 : vector<1x32xf32> to vector<8x32xf32>
    %129 = arith.addf %127, %128 : vector<8x32xf32>
    %cst_31 = arith.constant 0.000000e+00 : f32
    %130 = vector.broadcast %cst_31 : f32 to vector<8x32xf32>
    %131 = arith.maximumf %129, %130 : vector<8x32xf32>
    %132 = arith.truncf %131 : vector<8x32xf32> to vector<8x32xbf16>
    %c368 = arith.constant 368 : index
    %c0_32 = arith.constant 0 : index
    %133 = vector.load %arg4[%c368, %c0_32] : memref<400x256xbf16, #tpu.memory_space<vmem>>, vector<32x128xbf16>
    %cst_33 = arith.constant dense<0.000000e+00> : vector<8x128xf32>
    %134 = tpu.matmul %132, %133, %cst_33 {dimension_numbers = #tpu.dot_dimension_numbers<[1], [0], [0], [1], [0, 0, 1, 1], [], []>} : vector<8x32xbf16>, vector<32x128xbf16>, vector<8x128xf32> -> vector<8x128xf32>
    %135 = vector.broadcast %14 : vector<1x128xf32> to vector<8x128xf32>
    %136 = arith.addf %134, %135 : vector<8x128xf32>
    %c0_34 = arith.constant 0 : index
    %c0_35 = arith.constant 0 : index
    %137 = vector.load %arg6[%c0_34, %c0_35] : memref<8x128xf32, #tpu.memory_space<vmem>>, vector<8x128xf32>
    tpu.vector_store %arg6[%c0_34, %c0_35], %136 {strides = array<i32>} : memref<8x128xf32, #tpu.memory_space<vmem>>, vector<8x128xf32>,
    return
  }
}

</mosaic_0001>

<llo_original>
// kernel: bond_block_forward.1
$region0: #{bond_block_forward.1}
  #allocation0 [shape = 'u32[]', space=smem, size = 0x4, offset = 0x4, fixed_abs, tag = 'smem constant byte address 0x4 - core index']
  #allocation1 [shape = 'u32[144,128]{1,0:T(1,128)}', space=vmem, size = 0x12000, scoped, tag = 'internal scratch']
  %s0 = inlined_call_operand.vmem [shape: f32[8,32], index: 0, kind: input, shape index: {}]
  %s1 = inlined_call_operand.vmem [shape: f32[8,16], index: 1, kind: input, shape index: {}]
  %s2 = inlined_call_operand.vmem [shape: f32[8,1], index: 2, kind: input, shape index: {}]
  %s3 = inlined_call_operand.vmem [shape: s32[24,16], index: 3, kind: input, shape index: {}]
  %s4 = inlined_call_operand.hbm [shape: bf16[400,256], index: 4, kind: input, shape index: {}]
  %s5 = inlined_call_operand.vmem [shape: f32[8,128], index: 5, kind: input, shape index: {}]
  %s6 = inlined_call_operand.hbm [shape: f32[8,128], index: 6, kind: output, shape index: {}]
  %s7 = sld [smem:[#allocation0]]
  $region38: #{bond_block_forward.1} parent=0
    _
  %s9 = ssub.s32 1, %s7
  %s10 = scalar_select 0, %s9, %s7
  $region1: #{bond_block_forward.1} parent=0
    #allocation2 [shape = 'u8[204800]{0}', space=vmem, size = 0x32000, scoped, tag = 'input window, operand 4, single buffered']
    #allocation3 [shape = 's32[1]{0}', space=sflag, size = 0x4, scoped, tag = 'scoped memory for bond_block_forward.1']
    #allocation4 [shape = 's32[1]{0}', space=sflag, size = 0x4, scoped, tag = 'scoped memory for bond_block_forward.1']
    #allocation5 [shape = 'u8[4096]{0}', space=vmem, size = 0x1000, scoped, tag = 'output window, operand 0, single buffered']
    %11 = vsyncpa [#allocation3], 0
    %12 = vsyncpa [#allocation4], 0
    // Predicated region
    $region2: #{bond_block_forward.1} parent=1 // pred_check
      _
    $region3: #{bond_block_forward.1} parent=1 // pred_check_branch
      %14 = sbr.rel (0) target = $region5
    $region4: #{bond_block_forward.1} parent=1 // pred_region
      _
    $region5: #{bond_block_forward.1} parent=1 // pred_fallthru
      _
    // Predicated region
    $region6: #{bond_block_forward.1} parent=1 // pred_check
      _
    $region7: #{bond_block_forward.1} parent=1 // pred_check_branch
      %16 = sbr.rel (0) target = $region9
    $region8: #{bond_block_forward.1} parent=1 // pred_region
      _
    $region9: #{bond_block_forward.1} parent=1 // pred_fallthru
      _
    // Predicated region
    $region10: #{bond_block_forward.1} parent=1 // pred_check
      _
    $region11: #{bond_block_forward.1} parent=1 // pred_check_branch
      %18 = sbr.rel (0) target = $region13
    $region12: #{bond_block_forward.1} parent=1 // pred_region
      _
    $region13: #{bond_block_forward.1} parent=1 // pred_fallthru
      _
    // Predicated region
    $region14: #{bond_block_forward.1} parent=1 // pred_check
      _
    $region15: #{bond_block_forward.1} parent=1 // pred_check_branch
      %20 = sbr.rel (0) target = $region17
    $region16: #{bond_block_forward.1} parent=1 // pred_region
      _
    $region17: #{bond_block_forward.1} parent=1 // pred_fallthru
      _
    // Predicated region
    $region18: #{bond_block_forward.1} parent=1 // pred_check
      _
    $region19: #{bond_block_forward.1} parent=1 // pred_check_branch
      %22 = sbr.rel (0) target = $region21
    $region20: #{bond_block_forward.1} parent=1 // pred_region
      %s24 = ssub.s32 6400, 6400
      %25 = vsyncadd [#allocation3], %s24
      %s26 = sshll.u32 [#allocation2], 4
      %s27 = int_to_ptr.vmem [resolvable:$true] %s26
      %32 = dma.hbm_to_vmem [thread:$0]  %s4, 6400, %s27, [#allocation3], 128, 128, 8
    $region21: #{bond_block_forward.1} parent=1 // pred_fallthru
      _
    // Predicated region
    $region22: #{bond_block_forward.1} parent=1 // pred_check
      _
    $region23: #{bond_block_forward.1} parent=1 // pred_check_branch
      %34 = sbr.rel (0) target = $region25
    $region24: #{bond_block_forward.1} parent=1 // pred_region
      _
    $region25: #{bond_block_forward.1} parent=1 // pred_fallthru
      _
    // Predicated region
    $region26: #{bond_block_forward.1} parent=1 // pred_check
      _
    $region27: #{bond_block_forward.1} parent=1 // pred_check_branch
      %36 = sbr.rel (0) target = $region29
    $region28: #{bond_block_forward.1} parent=1 // pred_region
      %37 = dma.done [#allocation3], 6400
    $region29: #{bond_block_forward.1} parent=1 // pred_fallthru
      _
    %v39 = vld [vmem:[%s0] sm:$0xff]
    %v40 = vpack.c.bf16 %v39, %v39
    %v41 = vld [vmem:[%s1] sm:$0xff]
    %v42 = vpack.c.bf16 %v41, %v41
    %v43 = vld [vmem:[%s2] sm:$0xff]
    %v44 = vld [vmem:[%s3] sm:$0xff]
    %v45 = vld [vmem:[%s3 + $0x8] sm:$0xff]
    %v46 = vld [vmem:[%s3 + $0x10] sm:$0xff]
    %v47 = vld [vmem:[%s5] sm:$0xff]
    %v48 = vlaneseq
    %v49 = vshrl.u32 %v48, 7
    %v50 = vlaneseq
    %v51 = vand.u32 %v50, 127
    %vm52 = vcmp.eq.s32.totalorder %v49, %v44
    %v53 = vsel %vm52, 1, 0
    %v54 = vcvt.s32.f32 %v53
    %vm55 = vcmp.eq.s32.totalorder %v51, %v45
    %vm56 = vcmp.eq.s32.totalorder %v51, %v46
    %v57 = vsel %vm55, 1, 0
    %v58 = vsel %vm56, 1, 0
    %v59 = vcvt.s32.f32 %v57
    %v60 = vcvt.s32.f32 %v58
    %v61 = vpack.c.bf16 %v60, %v59
    %vm62 = vcmask 64512
    %v64 = vsel %vm62, %v61, 0
    %vm66 = vcmask 1043456
    %v68 = vsel %vm66, %v42, 0
    %70 = vmatprep.subr.bf16.mxu0 0
    %71 = vmatpush1.bf16.msra.mxu0 %v68
    %72 = vmatprep.subr.bf16.mxu0 0
    %73 = vmatpush1.bf16.msra.mxu0 0
    %74 = vmatprep.subr.bf16.mxu0 0
    %75 = vmatpush1.bf16.msra.mxu0 0
    %76 = vmatprep.subr.bf16.mxu0 0
    %77 = vmatpush1.bf16.msra.mxu0 0
    %78 = vmatprep.subr.bf16.mxu0 0
    %79 = vmatpush1.bf16.msra.mxu0 0
    %80 = vmatprep.subr.bf16.mxu0 0
    %81 = vmatpush1.bf16.msra.mxu0 0
    %82 = vmatprep.subr.bf16.mxu0 0
    %83 = vmatpush1.bf16.msra.mxu0 0
    %84 = vmatprep.subr.bf16.mxu0 0
    %85 = vmatpush1.bf16.msra.mxu0 0
    %86 = vmatprep.subr.bf16.mxu0 0
    %87 = vmatpush1.bf16.msra.mxu0 0
    %88 = vmatprep.subr.bf16.mxu0 0
    %89 = vmatpush1.bf16.msra.mxu0 0
    %90 = vmatprep.subr.bf16.mxu0 0
    %91 = vmatpush1.bf16.msra.mxu0 0
    %92 = vmatprep.subr.bf16.mxu0 0
    %93 = vmatpush1.bf16.msra.mxu0 0
    %94 = vmatprep.subr.bf16.mxu0 0
    %95 = vmatpush1.bf16.msra.mxu0 0
    %96 = vmatprep.subr.bf16.mxu0 0
    %97 = vmatpush1.bf16.msra.mxu0 0
    %98 = vmatprep.subr.bf16.mxu0 0
    %99 = vmatpush1.bf16.msra.mxu0 0
    %100 = vmatprep.subr.bf16.mxu0 0
    %101 = vmatpush1.bf16.msra.mxu0 0
    %102 = vmatprep.mubr.bf16.mxu0 0
    %103 = vmatmul.mubr.bf16.gmra.mrb[0].mxu0 %v64
    %v104 = vpop.f32.mrb[0].mxu0
    %v105 = vadd.f32 0.0, %v104
    %v106 = vpop.f32.mrb[0].mxu0
    %v107 = vpop.f32.mrb[0].mxu0
    %v108 = vadd.f32 0.0, %v107
    %v109 = vpop.f32.mrb[0].mxu0
    %110 = vdwg.mxu0
    %v111 = vpack.c.bf16 %v108, %v105
    %v112 = vld [vmem:[#allocation2] sm:$0xff]
    %v113 = vld [vmem:[#allocation2 + $0x8] sm:$0xff]
    %v114 = vld [vmem:[#allocation2 + $0x10] sm:$0xff]
    %v115 = vld [vmem:[#allocation2 + $0x18] sm:$0xff]
    %v120 = vunpack.c.l.b16 %v112
    %v121 = vunpack.c.h.b16 %v112
    %v122 = vunpack.c.l.b16 %v113
    %v123 = vunpack.c.h.b16 %v113
    %v124 = vunpack.c.l.b16 %v114
    %v125 = vunpack.c.h.b16 %v114
    %v126 = vunpack.c.l.b16 %v115
    %v127 = vunpack.c.h.b16 %v115
    %v128 = vpack.c.b16 %v122, %v120
    %v129 = vpack.c.b16 %v123, %v121
    %v130 = vpack.c.b16 %v126, %v124
    %v131 = vpack.c.b16 %v127, %v125
    %vm136 = vcmask 261120
    %v138 = vsel %vm136, %v40, 0
    %140 = vmatprep.subr.bf16.mxu0 %v129
    %141 = vmatpush1.bf16.msra.mxu0 %v128
    %142 = vmatprep.subr.bf16.mxu0 %v131
    %143 = vmatpush1.bf16.msra.mxu0 %v130
    %144 = vmatprep.subr.bf16.mxu0 0
    %145 = vmatpush1.bf16.msra.mxu0 0
    %146 = vmatprep.subr.bf16.mxu0 0
    %147 = vmatpush1.bf16.msra.mxu0 0
    %148 = vmatprep.subr.bf16.mxu0 0
    %149 = vmatpush1.bf16.msra.mxu0 0
    %150 = vmatprep.subr.bf16.mxu0 0
    %151 = vmatpush1.bf16.msra.mxu0 0
    %152 = vmatprep.subr.bf16.mxu0 0
    %153 = vmatpush1.bf16.msra.mxu0 0
    %154 = vmatprep.subr.bf16.mxu0 0
    %155 = vmatpush1.bf16.msra.mxu0 0
    %156 = vmatprep.subr.bf16.mxu0 0
    %157 = vmatpush1.bf16.msra.mxu0 0
    %158 = vmatprep.subr.bf16.mxu0 0
    %159 = vmatpush1.bf16.msra.mxu0 0
    %160 = vmatprep.subr.bf16.mxu0 0
    %161 = vmatpush1.bf16.msra.mxu0 0
    %162 = vmatprep.subr.bf16.mxu0 0
    %163 = vmatpush1.bf16.msra.mxu0 0
    %164 = vmatprep.subr.bf16.mxu0 0
    %165 = vmatpush1.bf16.msra.mxu0 0
    %166 = vmatprep.subr.bf16.mxu0 0
    %167 = vmatpush1.bf16.msra.mxu0 0
    %168 = vmatprep.subr.bf16.mxu0 0
    %169 = vmatpush1.bf16.msra.mxu0 0
    %170 = vmatprep.subr.bf16.mxu0 0
    %171 = vmatpush1.bf16.msra.mxu0 0
    %172 = vmatprep.mubr.bf16.mxu0 0
    %173 = vmatmul.mubr.bf16.gmra.mrb[0].mxu0 %v138
    %v174 = vpop.f32.mrb[0].mxu0
    %v175 = vadd.f32 0.0, %v174
    %v176 = vpop.f32.mrb[0].mxu0
    %v177 = vadd.f32 0.0, %v176
    %v178 = vpop.f32.mrb[0].mxu0
    %v179 = vpop.f32.mrb[0].mxu0
    %180 = vdwg.mxu0
    %v181 = vld [vmem:[#allocation2 + $0x20] sm:$0xff]
    %v182 = vld [vmem:[#allocation2 + $0x28] sm:$0xff]
    %v185 = vunpack.c.l.b16 %v181
    %v186 = vunpack.c.h.b16 %v181
    %v187 = vunpack.c.l.b16 %v182
    %v188 = vunpack.c.h.b16 %v182
    %v189 = vpack.c.b16 %v187, %v185
    %v190 = vpack.c.b16 %v188, %v186
    %vm193 = vcmask 130048
    %v195 = vsel %vm193, %v111, 0
    %197 = vmatprep.subr.bf16.mxu0 %v190
    %198 = vmatpush1.bf16.msra.mxu0 %v189
    %199 = vmatprep.subr.bf16.mxu0 0
    %200 = vmatpush1.bf16.msra.mxu0 0
    %201 = vmatprep.subr.bf16.mxu0 0
    %202 = vmatpush1.bf16.msra.mxu0 0
    %203 = vmatprep.subr.bf16.mxu0 0
    %204 = vmatpush1.bf16.msra.mxu0 0
    %205 = vmatprep.subr.bf16.mxu0 0
    %206 = vmatpush1.bf16.msra.mxu0 0
    %207 = vmatprep.subr.bf16.mxu0 0
    %208 = vmatpush1.bf16.msra.mxu0 0
    %209 = vmatprep.subr.bf16.mxu0 0
    %210 = vmatpush1.bf16.msra.mxu0 0
    %211 = vmatprep.subr.bf16.mxu0 0
    %212 = vmatpush1.bf16.msra.mxu0 0
    %213 = vmatprep.subr.bf16.mxu0 0
    %214 = vmatpush1.bf16.msra.mxu0 0
    %215 = vmatprep.subr.bf16.mxu0 0
    %216 = vmatpush1.bf16.msra.mxu0 0
    %217 = vmatprep.subr.bf16.mxu0 0
    %218 = vmatpush1.bf16.msra.mxu0 0
    %219 = vmatprep.subr.bf16.mxu0 0
    %220 = vmatpush1.bf16.msra.mxu0 0
    %221 = vmatprep.subr.bf16.mxu0 0
    %222 = vmatpush1.bf16.msra.mxu0 0
    %223 = vmatprep.subr.bf16.mxu0 0
    %224 = vmatpush1.bf16.msra.mxu0 0
    %225 = vmatprep.subr.bf16.mxu0 0
    %226 = vmatpush1.bf16.msra.mxu0 0
    %227 = vmatprep.subr.bf16.mxu0 0
    %228 = vmatpush1.bf16.msra.mxu0 0
    %229 = vmatprep.mubr.bf16.mxu0 0
    %230 = vmatmul.mubr.bf16.gmra.mrb[0].mxu0 %v195
    %v231 = vpop.f32.mrb[0].mxu0
    %v232 = vadd.f32 0.0, %v231
    %v233 = vpop.f32.mrb[0].mxu0
    %v234 = vadd.f32 0.0, %v233
    %v235 = vpop.f32.mrb[0].mxu0
    %v236 = vadd.f32 0.0, %v235
    %v237 = vpop.f32.mrb[0].mxu0
    %v238 = vadd.f32 0.0, %v237
    %239 = vdwg.mxu0
    %v240 = vadd.s32 %v51, 128
    %vm241 = vcmp.lt.s32.totalorder %v51, 64
    %vm242 = vcmp.lt.s32.totalorder %v240, 64
    %vm243 = vcmp.ge.s32.totalorder %v51, 128
    %vm244 = vcmp.ge.s32.totalorder %v240, 128
    %vm245 = vcmp.lt.s32.totalorder %v51, 160
    %vm246 = vcmp.lt.s32.totalorder %v240, 160
    %vm247 = vmand %vm243, %vm245
    %vm248 = vmand %vm244, %vm246
    %vm249 = vmor %vm241, %vm247
    %vm250 = vmor %vm242, %vm248
    %vm251 = vcmp.ge.s32.totalorder %v51, 192
    %vm252 = vcmp.ge.s32.totalorder %v240, 192
    %vm253 = vcmp.lt.s32.totalorder %v51, 224
    %vm254 = vcmp.lt.s32.totalorder %v240, 224
    %vm255 = vmand %vm251, %vm253
    %vm256 = vmand %vm252, %vm254
    %vm257 = vmor %vm249, %vm255
    %vm258 = vmor %vm250, %vm256
    %v259 = vsel %vm257, %v232, %v236
    %v260 = vsel %vm258, %v234, %v238
    %v261 = vmul.f32 %v175, %v259
    %v262 = vadd.f32 %v177, %v260
    %264 = vset.pattern.permute.xlu0 0
    %265 = vperm.xlu0 %264, %v43
    %v266 = vpop.permute.xlu0 %265
    %v268 = vlaneseq
    %v269 = vshrl.u32 %v268, 7
    %v270 = vsub.s32 3, %v269
    %v271 = vrot.slane %v47, %v270
    %v272 = vmul.f32 %v266, %v271
    %v273 = vadd.f32 %v262, %v272
    %v274 = vlaneseq
    %v275 = vshrl.u32 %v274, 7
    %v276 = vsub.s32 2, %v275
    %v277 = vrot.slane %v47, %v276
    %v278 = vadd.f32 %v273, %v277
    %v279 = vmax.f32 %v278, 0.0
    %281 = vrot.lane.b32.xlu0 %v260, 96
    %v282 = vpop.permute.xlu0 %281
    %v284 = vadd.f32 %v262, %v282
    %v285 = vlaneseq
    %v286 = vshrl.u32 %v285, 7
    %v287 = vsub.s32 4, %v286
    %v288 = vrot.slane %v47, %v287
    %290 = vrot.lane.b32.xlu0 %v288, 64
    %v291 = vpop.permute.xlu0 %290
    %v293 = vadd.f32 %v284, %v291
    %v294 = vpack.c.bf16 %v261, %v261
    %v295 = vld [vmem:[#allocation2 + $0x30] sm:$0xf]
    %v296 = vld [vmem:[#allocation2 + $0x38] sm:$0xf]
    %v297 = vld [vmem:[#allocation2 + $0x40] sm:$0xf]
    %v298 = vld [vmem:[#allocation2 + $0x48] sm:$0xf]
    %v299 = vld [vmem:[#allocation2 + $0x50] sm:$0xf]
    %v300 = vld [vmem:[#allocation2 + $0x58] sm:$0xf]
    %v301 = vld [vmem:[#allocation2 + $0x60] sm:$0xf]
    %v302 = vld [vmem:[#allocation2 + $0x68] sm:$0xf]
    %v303 = vld [vmem:[#allocation2 + $0x70] sm:$0xf]
    %v304 = vld [vmem:[#allocation2 + $0x78] sm:$0xf]
    %v305 = vld [vmem:[#allocation2 + $0x80] sm:$0xf]
    %v306 = vld [vmem:[#allocation2 + $0x88] sm:$0xf]
    %v307 = vld [vmem:[#allocation2 + $0x90] sm:$0xf]
    %v308 = vld [vmem:[#allocation2 + $0x98] sm:$0xf]
    %v309 = vld [vmem:[#allocation2 + $0xa0] sm:$0xf]
    %v310 = vld [vmem:[#allocation2 + $0xa8] sm:$0xf]
    %v311 = vlaneseq
    %v312 = vshrl.u32 %v311, 7
    %v313 = vsub.s32 0, %v312
    %v314 = vrot.slane %v47, %v313
    %v331 = vunpack.c.l.b16 %v295
    %v332 = vunpack.c.l.b16 %v296
    %v333 = vunpack.c.l.b16 %v297
    %v334 = vunpack.c.l.b16 %v298
    %v335 = vunpack.c.l.b16 %v299
    %v336 = vunpack.c.l.b16 %v300
    %v337 = vunpack.c.l.b16 %v301
    %v338 = vunpack.c.l.b16 %v302
    %v339 = vunpack.c.l.b16 %v303
    %v340 = vunpack.c.l.b16 %v304
    %v341 = vunpack.c.l.b16 %v305
    %v342 = vunpack.c.l.b16 %v306
    %v343 = vunpack.c.l.b16 %v307
    %v344 = vunpack.c.l.b16 %v308
    %v345 = vunpack.c.l.b16 %v309
    %v346 = vunpack.c.l.b16 %v310
    %v347 = vpack.c.b16 %v332, %v331
    %v348 = vpack.c.b16 %v334, %v333
    %v349 = vpack.c.b16 %v336, %v335
    %v350 = vpack.c.b16 %v338, %v337
    %v351 = vpack.c.b16 %v340, %v339
    %v352 = vpack.c.b16 %v342, %v341
    %v353 = vpack.c.b16 %v344, %v343
    %v354 = vpack.c.b16 %v346, %v345
    %363 = vmatprep.subr.bf16.mxu0 0
    %364 = vmatpush1.bf16.msra.mxu0 %v347
    %365 = vmatprep.subr.bf16.mxu0 0
    %366 = vmatpush1.bf16.msra.mxu0 %v348
    %367 = vmatprep.subr.bf16.mxu0 0
    %368 = vmatpush1.bf16.msra.mxu0 %v349
    %369 = vmatprep.subr.bf16.mxu0 0
    %370 = vmatpush1.bf16.msra.mxu0 %v350
    %371 = vmatprep.subr.bf16.mxu0 0
    %372 = vmatpush1.bf16.msra.mxu0 %v351
    %373 = vmatprep.subr.bf16.mxu0 0
    %374 = vmatpush1.bf16.msra.mxu0 %v352
    %375 = vmatprep.subr.bf16.mxu0 0
    %376 = vmatpush1.bf16.msra.mxu0 %v353
    %377 = vmatprep.subr.bf16.mxu0 0
    %378 = vmatpush1.bf16.msra.mxu0 %v354
    %379 = vmatprep.subr.bf16.mxu0 0
    %380 = vmatpush1.bf16.msra.mxu0 0
    %381 = vmatprep.subr.bf16.mxu0 0
    %382 = vmatpush1.bf16.msra.mxu0 0
    %383 = vmatprep.subr.bf16.mxu0 0
    %384 = vmatpush1.bf16.msra.mxu0 0
    %385 = vmatprep.subr.bf16.mxu0 0
    %386 = vmatpush1.bf16.msra.mxu0 0
    %387 = vmatprep.subr.bf16.mxu0 0
    %388 = vmatpush1.bf16.msra.mxu0 0
    %389 = vmatprep.subr.bf16.mxu0 0
    %390 = vmatpush1.bf16.msra.mxu0 0
    %391 = vmatprep.subr.bf16.mxu0 0
    %392 = vmatpush1.bf16.msra.mxu0 0
    %393 = vmatprep.subr.bf16.mxu0 0
    %394 = vmatpush1.bf16.msra.mxu0 0
    %395 = vmatprep.mubr.bf16.mxu0 0
    %396 = vmatmul.mubr.bf16.gmra.mrb[0].mxu0 %v294
    %v397 = vpop.f32.mrb[0].mxu0
    %v398 = vadd.f32 %v314, %v397
    %v399 = vpop.f32.mrb[0].mxu0
    %v400 = vpop.f32.mrb[0].mxu0
    %v401 = vpop.f32.mrb[0].mxu0
    %402 = vdwg.mxu0
    %v403 = vmax.f32 %v398, 0.0
    %v404 = vpack.c.bf16 %v403, %v403
    %v405 = vpack.c.bf16 %v279, %v279
    %v406 = vld [vmem:[#allocation2 + $0xb0] sm:$0xf]
    %v407 = vld [vmem:[#allocation2 + $0xb8] sm:$0xf]
    %v408 = vld [vmem:[#allocation2 + $0xc0] sm:$0xf]
    %v409 = vld [vmem:[#allocation2 + $0xc8] sm:$0xf]
    %v410 = vld [vmem:[#allocation2 + $0xd0] sm:$0xf]
    %v411 = vld [vmem:[#allocation2 + $0xd8] sm:$0xf]
    %v412 = vld [vmem:[#allocation2 + $0xe0] sm:$0xf]
    %v413 = vld [vmem:[#allocation2 + $0xe8] sm:$0xf]
    %v414 = vld [vmem:[#allocation2 + $0xf0] sm:$0xf]
    %v415 = vld [vmem:[#allocation2 + $0xf8] sm:$0xf]
    %v416 = vld [vmem:[#allocation2 + $0x100] sm:$0xf]
    %v417 = vld [vmem:[#allocation2 + $0x108] sm:$0xf]
    %v418 = vld [vmem:[#allocation2 + $0x110] sm:$0xf]
    %v419 = vld [vmem:[#allocation2 + $0x118] sm:$0xf]
    %v420 = vld [vmem:[#allocation2 + $0x120] sm:$0xf]
    %v421 = vld [vmem:[#allocation2 + $0x128] sm:$0xf]
    %v422 = vld [vmem:[#allocation2 + $0x130] sm:$0xf]
    %v423 = vld [vmem:[#allocation2 + $0x138] sm:$0xf]
    %v424 = vld [vmem:[#allocation2 + $0x140] sm:$0xf]
    %v425 = vld [vmem:[#allocation2 + $0x148] sm:$0xf]
    %v426 = vld [vmem:[#allocation2 + $0x150] sm:$0xf]
    %v427 = vld [vmem:[#allocation2 + $0x158] sm:$0xf]
    %v428 = vld [vmem:[#allocation2 + $0x160] sm:$0xf]
    %v429 = vld [vmem:[#allocation2 + $0x168] sm:$0xf]
    %v430 = vlaneseq
    %v431 = vshrl.u32 %v430, 7
    %v432 = vsub.s32 1, %v431
    %v433 = vrot.slane %v47, %v432
    %v458 = vunpack.c.l.b16 %v406
    %v459 = vunpack.c.l.b16 %v407
    %v460 = vunpack.c.l.b16 %v408
    %v461 = vunpack.c.l.b16 %v409
    %v462 = vunpack.c.l.b16 %v410
    %v463 = vunpack.c.l.b16 %v411
    %v464 = vunpack.c.l.b16 %v412
    %v465 = vunpack.c.l.b16 %v413
    %v466 = vunpack.c.l.b16 %v414
    %v467 = vunpack.c.l.b16 %v415
    %v468 = vunpack.c.l.b16 %v416
    %v469 = vunpack.c.l.b16 %v417
    %v470 = vunpack.c.l.b16 %v418
    %v471 = vunpack.c.l.b16 %v419
    %v472 = vunpack.c.l.b16 %v420
    %v473 = vunpack.c.l.b16 %v421
    %v474 = vunpack.c.l.b16 %v422
    %v475 = vunpack.c.l.b16 %v423
    %v476 = vunpack.c.l.b16 %v424
    %v477 = vunpack.c.l.b16 %v425
    %v478 = vunpack.c.l.b16 %v426
    %v479 = vunpack.c.l.b16 %v427
    %v480 = vunpack.c.l.b16 %v428
    %v481 = vunpack.c.l.b16 %v429
    %v482 = vpack.c.b16 %v459, %v458
    %v483 = vpack.c.b16 %v461, %v460
    %v484 = vpack.c.b16 %v463, %v462
    %v485 = vpack.c.b16 %v465, %v464
    %v486 = vpack.c.b16 %v467, %v466
    %v487 = vpack.c.b16 %v469, %v468
    %v488 = vpack.c.b16 %v471, %v470
    %v489 = vpack.c.b16 %v473, %v472
    %v490 = vpack.c.b16 %v475, %v474
    %v491 = vpack.c.b16 %v477, %v476
    %v492 = vpack.c.b16 %v479, %v478
    %v493 = vpack.c.b16 %v481, %v480
    %vm506 = vcmask 523264
    %v508 = vsel %vm506, %v405, 0
    %510 = vmatprep.subr.bf16.mxu0 0
    %511 = vmatpush1.bf16.msra.mxu0 %v482
    %512 = vmatprep.subr.bf16.mxu0 0
    %513 = vmatpush1.bf16.msra.mxu0 %v483
    %514 = vmatprep.subr.bf16.mxu0 0
    %515 = vmatpush1.bf16.msra.mxu0 %v484
    %516 = vmatprep.subr.bf16.mxu0 0
    %517 = vmatpush1.bf16.msra.mxu0 %v485
    %518 = vmatprep.subr.bf16.mxu0 0
    %519 = vmatpush1.bf16.msra.mxu0 %v486
    %520 = vmatprep.subr.bf16.mxu0 0
    %521 = vmatpush1.bf16.msra.mxu0 %v487
    %522 = vmatprep.subr.bf16.mxu0 0
    %523 = vmatpush1.bf16.msra.mxu0 %v488
    %524 = vmatprep.subr.bf16.mxu0 0
    %525 = vmatpush1.bf16.msra.mxu0 %v489
    %526 = vmatprep.subr.bf16.mxu0 0
    %527 = vmatpush1.bf16.msra.mxu0 %v490
    %528 = vmatprep.subr.bf16.mxu0 0
    %529 = vmatpush1.bf16.msra.mxu0 %v491
    %530 = vmatprep.subr.bf16.mxu0 0
    %531 = vmatpush1.bf16.msra.mxu0 %v492
    %532 = vmatprep.subr.bf16.mxu0 0
    %533 = vmatpush1.bf16.msra.mxu0 %v493
    %534 = vmatprep.subr.bf16.mxu0 0
    %535 = vmatpush1.bf16.msra.mxu0 0
    %536 = vmatprep.subr.bf16.mxu0 0
    %537 = vmatpush1.bf16.msra.mxu0 0
    %538 = vmatprep.subr.bf16.mxu0 0
    %539 = vmatpush1.bf16.msra.mxu0 0
    %540 = vmatprep.subr.bf16.mxu0 0
    %541 = vmatpush1.bf16.msra.mxu0 0
    %542 = vmatprep.mubr.bf16.mxu0 %v508
    %543 = vmatmul.mubr.bf16.gmra.mrb[0].mxu0 %v404
    %v544 = vpop.f32.mrb[0].mxu0
    %v545 = vadd.f32 %v433, %v544
    %v546 = vpop.f32.mrb[0].mxu0
    %v547 = vpop.f32.mrb[0].mxu0
    %v548 = vpop.f32.mrb[0].mxu0
    %549 = vdwg.mxu0
    %v550 = vxor.u32 %v545, 2147483648
    %v551 = vmul.f32 %v550, 1.442695
    %v552 = vpow.pop %v551
    %v553 = vadd.f32 %v552, 1.0
    %v554 = vrcp.pop %v553
    %v555 = vmul.f32 1.0, %v554
    %557 = vrot.lane.b32.xlu0 %v555, 64
    %v558 = vpop.permute.xlu0 %557
    %v560 = vmul.f32 %v545, %v558
    %vm561 = vcmp.lt.s32.totalorder %v51, 32
    %v562 = vsel %vm561, %v560, 0.0
    %v563 = vsel %vm561, 0.0, %v560
    %v565 = vsel %vm193, %v54, 0
    %567 = vmatprep.subr.mxu0 0.0
    %568 = vmatpush1.msra.mxu0 %v563
    %569 = vmatprep.subr.mxu0 0.0
    %570 = vmatpush1.msra.mxu0 %v562
    %571 = vmatprep.subr.mxu0 0.0
    %572 = vmatpush1.msra.mxu0 0.0
    %573 = vmatprep.subr.mxu0 0.0
    %574 = vmatpush1.msra.mxu0 0.0
    %575 = vmatprep.subr.mxu0 0.0
    %576 = vmatpush1.msra.mxu0 0.0
    %577 = vmatprep.subr.mxu0 0.0
    %578 = vmatpush1.msra.mxu0 0.0
    %579 = vmatprep.subr.mxu0 0.0
    %580 = vmatpush1.msra.mxu0 0.0
    %581 = vmatprep.subr.mxu0 0.0
    %582 = vmatpush1.msra.mxu0 0.0
    %583 = vmatprep.subr.mxu0 0.0
    %584 = vmatpush1.msra.mxu0 0.0
    %585 = vmatprep.subr.mxu0 0.0
    %586 = vmatpush1.msra.mxu0 0.0
    %587 = vmatprep.subr.mxu0 0.0
    %588 = vmatpush1.msra.mxu0 0.0
    %589 = vmatprep.subr.mxu0 0.0
    %590 = vmatpush1.msra.mxu0 0.0
    %591 = vmatprep.subr.mxu0 0.0
    %592 = vmatpush1.msra.mxu0 0.0
    %593 = vmatprep.subr.mxu0 0.0
    %594 = vmatpush1.msra.mxu0 0.0
    %595 = vmatprep.subr.mxu0 0.0
    %596 = vmatpush1.msra.mxu0 0.0
    %597 = vmatprep.subr.mxu0 0.0
    %598 = vmatpush1.msra.mxu0 0.0
    %599 = vmatprep.subr.mxu0 0.0
    %600 = vmatpush1.msra.mxu0 0.0
    %601 = vmatprep.subr.mxu0 0.0
    %602 = vmatpush1.msra.mxu0 0.0
    %603 = vmatprep.subr.mxu0 0.0
    %604 = vmatpush1.msra.mxu0 0.0
    %605 = vmatprep.subr.mxu0 0.0
    %606 = vmatpush1.msra.mxu0 0.0
    %607 = vmatprep.subr.mxu0 0.0
    %608 = vmatpush1.msra.mxu0 0.0
    %609 = vmatprep.subr.mxu0 0.0
    %610 = vmatpush1.msra.mxu0 0.0
    %611 = vmatprep.subr.mxu0 0.0
    %612 = vmatpush1.msra.mxu0 0.0
    %613 = vmatprep.subr.mxu0 0.0
    %614 = vmatpush1.msra.mxu0 0.0
    %615 = vmatprep.subr.mxu0 0.0
    %616 = vmatpush1.msra.mxu0 0.0
    %617 = vmatprep.subr.mxu0 0.0
    %618 = vmatpush1.msra.mxu0 0.0
    %619 = vmatprep.subr.mxu0 0.0
    %620 = vmatpush1.msra.mxu0 0.0
    %621 = vmatprep.subr.mxu0 0.0
    %622 = vmatpush1.msra.mxu0 0.0
    %623 = vmatprep.subr.mxu0 0.0
    %624 = vmatpush1.msra.mxu0 0.0
    %625 = vmatprep.subr.mxu0 0.0
    %626 = vmatpush1.msra.mxu0 0.0
    %627 = vmatprep.subr.mxu0 0.0
    %628 = vmatpush1.msra.mxu0 0.0
    %629 = vmatprep.subr.mxu0 0.0
    %630 = vmatpush1.msra.mxu0 0.0
    %631 = vmatprep.mubr.f32.mxu0 0.0
    %632 = vmatmul.mubr.f32.gmra.mrb[0].mxu0 %v565
    %v633 = vpop.f32.mrb[0].mxu0
    %v634 = vadd.f32 0.0, %v633
    %v635 = vpop.f32.mrb[0].mxu0
    %636 = vdwg.mxu0
    %v638 = vsel %vm62, %v59, 0
    %v641 = vsel %vm62, %v60, 0
    %643 = vmatprep.subr.mxu0 0.0
    %644 = vmatpush1.msra.mxu0 %v634
    %645 = vmatprep.subr.mxu0 0.0
    %646 = vmatpush1.msra.mxu0 0.0
    %647 = vmatprep.subr.mxu0 0.0
    %648 = vmatpush1.msra.mxu0 0.0
    %649 = vmatprep.subr.mxu0 0.0
    %650 = vmatpush1.msra.mxu0 0.0
    %651 = vmatprep.subr.mxu0 0.0
    %652 = vmatpush1.msra.mxu0 0.0
    %653 = vmatprep.subr.mxu0 0.0
    %654 = vmatpush1.msra.mxu0 0.0
    %655 = vmatprep.subr.mxu0 0.0
    %656 = vmatpush1.msra.mxu0 0.0
    %657 = vmatprep.subr.mxu0 0.0
    %658 = vmatpush1.msra.mxu0 0.0
    %659 = vmatprep.subr.mxu0 0.0
    %660 = vmatpush1.msra.mxu0 0.0
    %661 = vmatprep.subr.mxu0 0.0
    %662 = vmatpush1.msra.mxu0 0.0
    %663 = vmatprep.subr.mxu0 0.0
    %664 = vmatpush1.msra.mxu0 0.0
    %665 = vmatprep.subr.mxu0 0.0
    %666 = vmatpush1.msra.mxu0 0.0
    %667 = vmatprep.subr.mxu0 0.0
    %668 = vmatpush1.msra.mxu0 0.0
    %669 = vmatprep.subr.mxu0 0.0
    %670 = vmatpush1.msra.mxu0 0.0
    %671 = vmatprep.subr.mxu0 0.0
    %672 = vmatpush1.msra.mxu0 0.0
    %673 = vmatprep.subr.mxu0 0.0
    %674 = vmatpush1.msra.mxu0 0.0
    %675 = vmatprep.subr.mxu0 0.0
    %676 = vmatpush1.msra.mxu0 0.0
    %677 = vmatprep.subr.mxu0 0.0
    %678 = vmatpush1.msra.mxu0 0.0
    %679 = vmatprep.subr.mxu0 0.0
    %680 = vmatpush1.msra.mxu0 0.0
    %681 = vmatprep.subr.mxu0 0.0
    %682 = vmatpush1.msra.mxu0 0.0
    %683 = vmatprep.subr.mxu0 0.0
    %684 = vmatpush1.msra.mxu0 0.0
    %685 = vmatprep.subr.mxu0 0.0
    %686 = vmatpush1.msra.mxu0 0.0
    %687 = vmatprep.subr.mxu0 0.0
    %688 = vmatpush1.msra.mxu0 0.0
    %689 = vmatprep.subr.mxu0 0.0
    %690 = vmatpush1.msra.mxu0 0.0
    %691 = vmatprep.subr.mxu0 0.0
    %692 = vmatpush1.msra.mxu0 0.0
    %693 = vmatprep.subr.mxu0 0.0
    %694 = vmatpush1.msra.mxu0 0.0
    %695 = vmatprep.subr.mxu0 0.0
    %696 = vmatpush1.msra.mxu0 0.0
    %697 = vmatprep.subr.mxu0 0.0
    %698 = vmatpush1.msra.mxu0 0.0
    %699 = vmatprep.subr.mxu0 0.0
    %700 = vmatpush1.msra.mxu0 0.0
    %701 = vmatprep.subr.mxu0 0.0
    %702 = vmatpush1.msra.mxu0 0.0
    %703 = vmatprep.subr.mxu0 0.0
    %704 = vmatpush1.msra.mxu0 0.0
    %705 = vmatprep.subr.mxu0 0.0
    %706 = vmatpush1.msra.mxu0 0.0
    %707 = vmatprep.mubr.f32.mxu0 0.0
    %708 = vmatmul.mubr.f32.gmra.mrb[0].mxu0 %v638
    %v709 = vpop.f32.mrb[0].mxu0
    %v710 = vadd.f32 0.0, %v709
    %v711 = vpop.f32.mrb[0].mxu0
    %712 = vmatprep.mubr.f32.mxu0 0.0
    %713 = vmatmul.mubr.f32.gmra.mrb[0].mxu0 %v641
    %v714 = vpop.f32.mrb[0].mxu0
    %v715 = vadd.f32 0.0, %v714
    %v716 = vpop.f32.mrb[0].mxu0
    %717 = vdwg.mxu0
    %719 = vrot.lane.b32.xlu0 %v715, 96
    %v720 = vpop.permute.xlu0 %719
    %v722 = vadd.f32 %v710, %v720
    %724 = vrot.lane.b32.xlu0 %v293, 64
    %v725 = vpop.permute.xlu0 %724
    %v727 = vadd.f32 %v722, %v725
    %v728 = vsel %vm136, %v727, 0.0
    %729 = vadd.xlane.f32.xlu0 %v728
    %v730 = vpop.xlane.xlu0 %729
    %v731 = vrcp.pop 32.0
    %v732 = vmul.f32 %v730, %v731
    %v733 = vsub.f32 %v727, %v732
    %v734 = vmul.f32 %v733, %v733
    %v735 = vsel %vm136, %v734, 0.0
    %736 = vadd.xlane.f32.xlu0 %v735
    %v737 = vpop.xlane.xlu0 %736
    %v738 = vmul.f32 %v737, %v731
    %v739 = vadd.f32 %v738, 1e-05
    %v740 = vrsqrt.pop %v739
    %v741 = vmul.f32 %v733, %v740
    %v742 = vlaneseq
    %v743 = vshrl.u32 %v742, 7
    %v744 = vsub.s32 5, %v743
    %v745 = vrot.slane %v47, %v744
    %v746 = vmul.f32 %v741, %v745
    %v747 = vlaneseq
    %v748 = vshrl.u32 %v747, 7
    %v749 = vsub.s32 6, %v748
    %v750 = vrot.slane %v47, %v749
    %v751 = vadd.f32 %v746, %v750
    %v752 = vmax.f32 %v751, 0.0
    %v753 = vpack.c.bf16 %v752, %v752
    %v754 = vld [vmem:[#allocation2 + $0x170] sm:$0xf]
    %v755 = vld [vmem:[#allocation2 + $0x178] sm:$0xf]
    %v756 = vld [vmem:[#allocation2 + $0x180] sm:$0xf]
    %v757 = vld [vmem:[#allocation2 + $0x188] sm:$0xf]
    %v758 = vlaneseq
    %v759 = vshrl.u32 %v758, 7
    %v760 = vsub.s32 7, %v759
    %v761 = vrot.slane %v47, %v760
    %v766 = vunpack.c.l.b16 %v754
    %v767 = vunpack.c.l.b16 %v755
    %v768 = vunpack.c.l.b16 %v756
    %v769 = vunpack.c.l.b16 %v757
    %v770 = vpack.c.b16 %v767, %v766
    %v771 = vpack.c.b16 %v769, %v768
    %v775 = vsel %vm136, %v753, 0
    %777 = vmatprep.subr.bf16.mxu0 0
    %778 = vmatpush1.bf16.msra.mxu0 %v770
    %779 = vmatprep.subr.bf16.mxu0 0
    %780 = vmatpush1.bf16.msra.mxu0 %v771
    %781 = vmatprep.subr.bf16.mxu0 0
    %782 = vmatpush1.bf16.msra.mxu0 0
    %783 = vmatprep.subr.bf16.mxu0 0
    %784 = vmatpush1.bf16.msra.mxu0 0
    %785 = vmatprep.subr.bf16.mxu0 0
    %786 = vmatpush1.bf16.msra.mxu0 0
    %787 = vmatprep.subr.bf16.mxu0 0
    %788 = vmatpush1.bf16.msra.mxu0 0
    %789 = vmatprep.subr.bf16.mxu0 0
    %790 = vmatpush1.bf16.msra.mxu0 0
    %791 = vmatprep.subr.bf16.mxu0 0
    %792 = vmatpush1.bf16.msra.mxu0 0
    %793 = vmatprep.subr.bf16.mxu0 0
    %794 = vmatpush1.bf16.msra.mxu0 0
    %795 = vmatprep.subr.bf16.mxu0 0
    %796 = vmatpush1.bf16.msra.mxu0 0
    %797 = vmatprep.subr.bf16.mxu0 0
    %798 = vmatpush1.bf16.msra.mxu0 0
    %799 = vmatprep.subr.bf16.mxu0 0
    %800 = vmatpush1.bf16.msra.mxu0 0
    %801 = vmatprep.subr.bf16.mxu0 0
    %802 = vmatpush1.bf16.msra.mxu0 0
    %803 = vmatprep.subr.bf16.mxu0 0
    %804 = vmatpush1.bf16.msra.mxu0 0
    %805 = vmatprep.subr.bf16.mxu0 0
    %806 = vmatpush1.bf16.msra.mxu0 0
    %807 = vmatprep.subr.bf16.mxu0 0
    %808 = vmatpush1.bf16.msra.mxu0 0
    %809 = vmatprep.mubr.bf16.mxu0 0
    %810 = vmatmul.mubr.bf16.gmra.mrb[0].mxu0 %v775
    %v811 = vpop.f32.mrb[0].mxu0
    %v812 = vadd.f32 %v761, %v811
    %v813 = vpop.f32.mrb[0].mxu0
    %v814 = vpop.f32.mrb[0].mxu0
    %v815 = vpop.f32.mrb[0].mxu0
    %816 = vdwg.mxu0
    %817 = vst [vmem:[#allocation5] sm:$0xff] %v812
    // Predicated region
    $region30: #{bond_block_forward.1} parent=1 // pred_check
      _
    $region31: #{bond_block_forward.1} parent=1 // pred_check_branch
      %819 = sbr.rel (0) target = $region33
    $region32: #{bond_block_forward.1} parent=1 // pred_region
      %s821 = ssub.s32 128, 128
      %822 = vsyncadd [#allocation4], %s821
      %s824 = sshll.u32 [#allocation5], 4
      %s825 = int_to_ptr.vmem [resolvable:$true] %s824
      %827 = dma.vmem_to_hbm [thread:$0]  %s825, 128, %s6, [#allocation4]
    $region33: #{bond_block_forward.1} parent=1 // pred_fallthru
      _
    // Predicated region
    $region34: #{bond_block_forward.1} parent=1 // pred_check
      _
    $region35: #{bond_block_forward.1} parent=1 // pred_check_branch
      %829 = sbr.rel (0) target = $region37
    $region36: #{bond_block_forward.1} parent=1 // pred_region
      %830 = dma.done [#allocation4], 128
    $region37: #{bond_block_forward.1} parent=1 // pred_fallthru
      _
    %831 = vsyncpa [#allocation3], 1
    %832 = vsyncpa [#allocation4], 1

</llo_original>
